<compile_context>
chip_gen: v7x
topology: tpu7x:2x2x1
jax: 0.10.0
libtpu: 0.0.40
codegen_flags: <defaults>
</compile_context>

<pallas_src>
import functools

import jax
import jax.numpy as jnp
from jax import lax
from jax.experimental import pallas as pl
from jax.experimental.pallas import tpu as pltpu

LANE = 128
SUBLANE = 8


def _round_up(x, m):
    return ((x + m - 1) // m) * m


def _pad2d(x, rows, cols):
    r, c = x.shape
    return jnp.pad(x, ((0, rows - r), (0, cols - c)))


def _vmem_capacity_bytes():
    """Per-core VMEM capacity; conservative fallback if unavailable."""
    try:
        info = pltpu.get_tpu_info()
        cap = getattr(info, "vmem_capacity_bytes", None)
        if cap:
            return int(cap)
    except Exception:
        pass
    return 64 * 1024 * 1024   # v7x per-TC physical VMEM (most restrictive)


_VMEM_SPEC = pl.BlockSpec(memory_space=pltpu.MemorySpace.VMEM)


# ----------------------------------------------------------------------------
# Kernel 1 (main forward path): fused CLS encoder-proxy + classifier head + CE.
#   seq_cls = tanh(cls_emb @ W_enc + b_enc) * cls_mask
#   h1      = tanh(seq_cls @ Wd + bd)
#   h2      = tanh(h1      @ Wl + bl)          -> last_hidden_state
#   logits  = h2 @ Wo + bo
#   loss    = mean over valid rows of (logsumexp(logits[:L]) - logits[label])
# Gridless call: every operand is a whole-array VMEM ref (single-buffered).
# Activations/weights arrive in bf16 (MXU), biases/mask/labels drive the f32 tail.
# ----------------------------------------------------------------------------
def fused_cls_forward_kernel(cls_ref, mask_ref, labels_ref,
                             w_enc_ref, b_enc_ref,
                             w_d_ref, b_d_ref,
                             w_l_ref, b_l_ref,
                             w_o_ref, b_o_ref,
                             logits_ref, lasthid_ref, loss_ref,
                             *, num_labels):
    x = cls_ref[...]                                                     # [Bp, H] bf16
    mask = mask_ref[...]                                                 # [Bp, 1] f32

    # --- encoder proxy on the CLS rows only (bf16 MXU in, f32 acc + tail) ---
    h = jnp.dot(x, w_enc_ref[...], preferred_element_type=jnp.float32)
    seq_cls = jnp.tanh(h + b_enc_ref[...]) * mask

    # --- classification head (dropout == identity in eval mode) ---
    h1 = jnp.tanh(jnp.dot(seq_cls.astype(jnp.bfloat16), w_d_ref[...],
                          preferred_element_type=jnp.float32) + b_d_ref[...])
    h2 = jnp.tanh(jnp.dot(h1.astype(jnp.bfloat16), w_l_ref[...],
                          preferred_element_type=jnp.float32) + b_l_ref[...])
    lasthid_ref[...] = h2                                                # last_hidden_state
    logits = jnp.dot(h2.astype(jnp.bfloat16), w_o_ref[...],
                     preferred_element_type=jnp.float32) + b_o_ref[...]
    logits_ref[...] = logits                                             # [Bp, Lp] lane-dense

    # --- CrossEntropyLoss (single_label_classification), ignore_index (<0) aware ---
    lab = labels_ref[...]                                                # [Bp, 1] i32 (pads = -1)
    col = lax.broadcasted_iota(jnp.int32, logits.shape, 1)
    masked = jnp.where(col < num_labels, logits, jnp.float32(-1e30))     # hide padded labels
    m = jnp.max(masked, axis=-1, keepdims=True)
    lse = m + jnp.log(jnp.sum(jnp.exp(masked - m), axis=-1, keepdims=True))
    onehot = (col == lab).astype(jnp.float32)                            # built in-kernel
    picked = jnp.sum(logits * onehot, axis=-1, keepdims=True)
    w = (lab >= 0).astype(jnp.float32)                                   # 0 for ignored / pad rows
    num = jnp.sum(w * (lse - picked))
    den = jnp.maximum(jnp.sum(w), jnp.float32(1.0))
    # lane-dense (1, 128) slab instead of a (1, 1) masked store
    loss_ref[...] = jnp.full(loss_ref.shape, num / den, dtype=jnp.float32)


def fused_cls_forward(cls_emb_bf, cls_mask, labels_col, prepared, num_labels):
    Bp = cls_emb_bf.shape[0]
    LHp = prepared["w_last_bf"].shape[1]
    Lp = prepared["w_out_bf"].shape[1]
    kernel = functools.partial(fused_cls_forward_kernel, num_labels=num_labels)
    out_shapes = (jax.ShapeDtypeStruct((Bp, Lp), jnp.float32),    # logits (padded)
                  jax.ShapeDtypeStruct((Bp, LHp), jnp.float32),   # last_hidden_state (padded)
                  jax.ShapeDtypeStruct((1, LANE), jnp.float32))   # loss slab
    # TODO(synk): for very large batches, tile over Bp/8-row blocks with
    # dimension_semantics=("parallel",) to use both v7x TensorCores.
    return pl.pallas_call(
        kernel,
        out_shape=out_shapes,
        in_specs=[_VMEM_SPEC] * 11,
        out_specs=(_VMEM_SPEC, _VMEM_SPEC, _VMEM_SPEC),
    )(cls_emb_bf, cls_mask, labels_col,
      prepared["w_enc_bf"], prepared["b_enc"],
      prepared["w_dense_bf"], prepared["b_dense"],
      prepared["w_last_bf"], prepared["b_last"],
      prepared["w_out_bf"], prepared["b_out"])


# ----------------------------------------------------------------------------
# Kernel 2 (optional path): tiled full-sequence encoder proxy.
# Only needed if sequence_output itself is required.  Tiled over B*S rows with
# resident bf16 weights, bf16 MXU inputs, f32 accumulation/tail, bf16 writeback.
# ----------------------------------------------------------------------------
def encoder_proxy_kernel(emb_ref, mask_ref, w_ref, b_ref, out_ref):
    h = jnp.dot(emb_ref[...], w_ref[...],
                preferred_element_type=jnp.float32)       # bf16 in, f32 acc (MXU)
    h = jnp.tanh(h + b_ref[...]) * mask_ref[...]          # f32 tail (v5e: no bf16 VPU/EUP)
    out_ref[...] = h.astype(out_ref.dtype)                # bf16 writeback (cuts HBM traffic)


@functools.partial(jax.jit, static_argnames=("tile_cap",))
def encoder_proxy_full(embed_bf, w_enc_bf, b_enc, input_ids, attention_mask,
                       tile_cap=1024):
    B, S = input_ids.shape
    H = embed_bf.shape[1]
    BS = B * S

    # Gather straight from the pre-cast bf16 table: no f32 [BS,H] slab + re-cast.
    # TODO(synk): fuse the gather into the kernel (scalar-prefetched ids + manual
    # per-row DMA gather) to also skip the bf16 slab materialization in XLA.
    emb_flat = jnp.take(embed_bf, input_ids.reshape(-1), axis=0)     # bf16 [BS, H]
    mask_flat = attention_mask.reshape(-1, 1).astype(jnp.float32)    # [BS, 1]

    # --- per-generation VMEM budget (v7x: 64 MiB physical; v5e/v6e: 128 MiB) ---
    cap = _vmem_capacity_bytes()
    scoped = max(32 * 1024 * 1024, min(int(cap * 0.70), 96 * 1024 * 1024))
    resident = 2 * (H * H * 2 + H * 4)                 # (double-buffered) bf16 weight + f32 bias
    per_row = 2 * (H * 2 + H * 2 + 4)                  # double-buffered bf16 in/out + f32 mask
    budget = max(scoped - resident - (4 << 20), per_row * SUBLANE)
    tile = min(tile_cap, (budget // per_row) // SUBLANE * SUBLANE)
    tile = max(SUBLANE, tile)
    if tile >= BS:
        if BS > SUBLANE:
            # guarantee >= 2 grid steps so "parallel" can shard across v7x's 2 TCs
            tile = _round_up(pl.cdiv(BS, 2), SUBLANE)
        else:
            tile = BS
    grid = (pl.cdiv(BS, tile),)

    return pl.pallas_call(
        encoder_proxy_kernel,
        out_shape=jax.ShapeDtypeStruct((BS, H), jnp.bfloat16),
        grid=grid,
        in_specs=[pl.BlockSpec((tile, H), lambda i: (i, 0)),   # emb tile (bf16)
                  pl.BlockSpec((tile, 1), lambda i: (i, 0)),   # mask tile (f32, lane-sparse; minor)
                  pl.BlockSpec((H, H), lambda i: (0, 0)),      # resident bf16 weight
                  pl.BlockSpec((1, H), lambda i: (0, 0))],     # resident f32 bias
        out_specs=pl.BlockSpec((tile, H), lambda i: (i, 0)),
        compiler_params=pltpu.CompilerParams(
            dimension_semantics=("parallel",),                 # megacore on v7x
            vmem_limit_bytes=int(scoped)),
    )(emb_flat, mask_flat, w_enc_bf, b_enc)


# ----------------------------------------------------------------------------
# Params + one-time preparation + forward wrapper
# ----------------------------------------------------------------------------
def init_params(key, vocab, H, LH, num_labels):
    # deterministic synthetic init; linear weights stored [in, out] (y = x @ W + b)
    ks = jax.random.split(key, 8)
    s = 0.05
    return {
        "embed":   jax.random.normal(ks[0], (vocab, H), jnp.float32) * s,
        "w_enc":   jax.random.normal(ks[1], (H, H),     jnp.float32) * s,
        "b_enc":   jnp.zeros((1, H), jnp.float32),
        "w_dense": jax.random.normal(ks[2], (H, H),     jnp.float32) * s,
        "b_dense": jax.random.normal(ks[3], (1, H),     jnp.float32) * s,
        "w_last":  jax.random.normal(ks[4], (H, LH),    jnp.float32) * s,
        "b_last":  jax.random.normal(ks[5], (1, LH),    jnp.float32) * s,
        "w_out":   jax.random.normal(ks[6], (LH, num_labels), jnp.float32) * s,
        "b_out":   jax.random.normal(ks[7], (1, num_labels),  jnp.float32) * s,
    }


def prepare_params(params, num_labels):
    """One-time lane padding + bf16 casting, hoisted out of the per-call forward."""
    H = params["w_enc"].shape[0]
    LH = params["w_last"].shape[1]
    LHp = _round_up(LH, LANE)
    Lp = _round_up(num_labels, LANE)
    return {
        "embed_bf":   params["embed"].astype(jnp.bfloat16),
        "w_enc_bf":   params["w_enc"].astype(jnp.bfloat16),
        "b_enc":      params["b_enc"].astype(jnp.float32),
        "w_dense_bf": params["w_dense"].astype(jnp.bfloat16),
        "b_dense":    params["b_dense"].astype(jnp.float32),
        "w_last_bf":  _pad2d(params["w_last"], H, LHp).astype(jnp.bfloat16),
        "b_last":     _pad2d(params["b_last"], 1, LHp).astype(jnp.float32),
        "w_out_bf":   _pad2d(params["w_out"], LHp, Lp).astype(jnp.bfloat16),
        "b_out":      _pad2d(params["b_out"], 1, Lp).astype(jnp.float32),
    }


@functools.partial(jax.jit,
                   static_argnames=("num_labels", "last_hidden_size", "return_embeddings"))
def clinical_longformer_forward(prepared, input_ids, attention_mask, labels,
                                num_labels, last_hidden_size,
                                return_embeddings=False):
    """Mirrors ClinicalLongformerForSequenceClassification.forward (eval mode)."""
    B, S = input_ids.shape

    # global_attention_mask = zeros_like(input_ids); [:, 0] = 1  (fed only to the real
    # external Longformer encoder, which the token-local proxy stands in for).
    # TODO(synk): full Longformer sliding-window + global attention is not translated.

    # Only sequence_output[:, 0, :] is consumed downstream and the proxy encoder is
    # token-local, so encode just the CLS rows — never build the [B*S, H] slab.
    cls_ids = input_ids[:, 0]                                            # [B]
    cls_emb = jnp.take(prepared["embed_bf"], cls_ids, axis=0)            # bf16 [B, H]
    cls_mask = attention_mask[:, 0].astype(jnp.float32)[:, None]         # [B, 1]

    Bp = _round_up(B, SUBLANE)
    H = cls_emb.shape[1]
    cls_emb_p = _pad2d(cls_emb, Bp, H)
    cls_mask_p = _pad2d(cls_mask, Bp, 1)
    # label < 0 (PyTorch ignore_index) -> excluded; padded rows use -1.
    lab = labels.astype(jnp.int32)
    lab_p = jnp.pad(lab, (0, Bp - B), constant_values=-1)[:, None]       # [Bp, 1]

    logits_p, lasthid_p, loss_slab = fused_cls_forward(
        cls_emb_p, cls_mask_p, lab_p, prepared, num_labels)

    logits = logits_p[:B, :num_labels]
    last_hidden = lasthid_p[:B, :last_hidden_size]
    loss = loss_slab[0, 0]

    if return_embeddings:
        return last_hidden
    return {"loss": loss, "logits": logits, "attentions": None}


if __name__ == "__main__":
    B, S, H, LH, NUM_LABELS, VOCAB = 2, 8, 32, 16, 3, 50

    key = jax.random.PRNGKey(0)
    k_params, k_ids, k_labels = jax.random.split(key, 3)

    params = init_params(k_params, VOCAB, H, LH, NUM_LABELS)
    prepared = prepare_params(params, NUM_LABELS)
    input_ids = jax.random.randint(k_ids, (B, S), 0, VOCAB, dtype=jnp.int32)
    attention_mask = jnp.ones((B, S), dtype=jnp.int32)
    labels = jax.random.randint(k_labels, (B,), 0, NUM_LABELS, dtype=jnp.int32)

    # --- fused forward (CLS encoder proxy + head + CE loss, one gridless pallas_call) ---
    out = clinical_longformer_forward(prepared, input_ids, attention_mask, labels,
                                      num_labels=NUM_LABELS, last_hidden_size=LH,
                                      return_embeddings=False)
    out = jax.block_until_ready(out)

    emb_out = clinical_longformer_forward(prepared, input_ids, attention_mask, labels,
                                          num_labels=NUM_LABELS, last_hidden_size=LH,
                                          return_embeddings=True)
    emb_out = jax.block_until_ready(emb_out)

    assert out["logits"].shape == (B, NUM_LABELS)
    assert emb_out.shape == (B, LH)
    assert bool(jnp.isfinite(out["loss"]))

    # --- cross-check the fused kernel against a pure-JAX float32 reference
    #     (kernel feeds bf16 to the MXU, hence the looser tolerance) ---
    cls_emb = params["embed"][input_ids[:, 0]]
    m0 = attention_mask[:, 0].astype(jnp.float32)[:, None]
    seq = jnp.tanh(cls_emb @ params["w_enc"] + params["b_enc"]) * m0
    h1 = jnp.tanh(seq @ params["w_dense"] + params["b_dense"])
    h2 = jnp.tanh(h1 @ params["w_last"] + params["b_last"])
    ref_logits = h2 @ params["w_out"] + params["b_out"]
    ref_lse = jax.nn.logsumexp(ref_logits, axis=-1)
    ref_picked = jnp.take_along_axis(ref_logits, labels[:, None], axis=-1)[:, 0]
    ref_loss = jnp.mean(ref_lse - ref_picked)
    assert bool(jnp.allclose(out["logits"], ref_logits, atol=3e-2, rtol=3e-2))
    assert bool(jnp.allclose(emb_out, h2, atol=3e-2, rtol=3e-2))
    assert bool(jnp.allclose(out["loss"], ref_loss, atol=3e-2, rtol=3e-2))

    # --- exercise the tiled full-sequence encoder proxy (bf16 in/out, f32 acc/tail) ---
    seq_full = encoder_proxy_full(prepared["embed_bf"], prepared["w_enc_bf"],
                                  prepared["b_enc"], input_ids, attention_mask)
    seq_full = jax.block_until_ready(seq_full)
    emb_flat_f32 = prepared["embed_bf"].astype(jnp.float32)[input_ids.reshape(-1)]
    mask_flat = attention_mask.reshape(-1, 1).astype(jnp.float32)
    ref_full = jnp.tanh(emb_flat_f32 @ params["w_enc"] + params["b_enc"]) * mask_flat
    assert seq_full.shape == (B * S, H)
    assert bool(jnp.allclose(seq_full.astype(jnp.float32), ref_full,
                             atol=3e-2, rtol=3e-2))   # bf16 tolerance

    print("KERNEL_OK")
</pallas_src>

<mosaic_0001>
module attributes {stable_mosaic.version = 11 : i64} {
  func.func @fused_cls_forward_kernel(%arg0: memref<8x32xbf16, #tpu.memory_space<vmem>>, %arg1: memref<8x1xf32, #tpu.memory_space<vmem>>, %arg2: memref<8x1xi32, #tpu.memory_space<vmem>>, %arg3: memref<32x32xbf16, #tpu.memory_space<vmem>>, %arg4: memref<1x32xf32, #tpu.memory_space<vmem>>, %arg5: memref<32x32xbf16, #tpu.memory_space<vmem>>, %arg6: memref<1x32xf32, #tpu.memory_space<vmem>>, %arg7: memref<32x128xbf16, #tpu.memory_space<vmem>>, %arg8: memref<1x128xf32, #tpu.memory_space<vmem>>, %arg9: memref<128x128xbf16, #tpu.memory_space<vmem>>, %arg10: memref<1x128xf32, #tpu.memory_space<vmem>>, %arg11: memref<8x128xf32, #tpu.memory_space<vmem>>, %arg12: memref<8x128xf32, #tpu.memory_space<vmem>>, %arg13: memref<1x128xf32, #tpu.memory_space<vmem>>) attributes {dimension_semantics = [], scalar_prefetch = 0 : i64, scratch_operands = 0 : i64, tpu.core_type = #tpu.core_type<tc>} {
    %c0 = arith.constant 0 : index
    %c0_0 = arith.constant 0 : index
    %0 = vector.load %arg0[%c0, %c0_0] : memref<8x32xbf16, #tpu.memory_space<vmem>>, vector<8x32xbf16>
    %c0_1 = arith.constant 0 : index
    %c0_2 = arith.constant 0 : index
    %1 = vector.load %arg1[%c0_1, %c0_2] : memref<8x1xf32, #tpu.memory_space<vmem>>, vector<8x1xf32>
    %c0_3 = arith.constant 0 : index
    %c0_4 = arith.constant 0 : index
    %2 = vector.load %arg3[%c0_3, %c0_4] : memref<32x32xbf16, #tpu.memory_space<vmem>>, vector<32x32xbf16>
    %cst = arith.constant dense<0.000000e+00> : vector<8x32xf32>
    %3 = tpu.matmul %0, %2, %cst {dimension_numbers = #tpu.dot_dimension_numbers<[1], [0], [0], [1], [0, 0, 1, 1], [], []>} : vector<8x32xbf16>, vector<32x32xbf16>, vector<8x32xf32> -> vector<8x32xf32>
    %c0_5 = arith.constant 0 : index
    %c0_6 = arith.constant 0 : index
    %4 = vector.load %arg4[%c0_5, %c0_6] : memref<1x32xf32, #tpu.memory_space<vmem>>, vector<1x32xf32>
    %5 = vector.broadcast %4 : vector<1x32xf32> to vector<8x32xf32>
    %6 = arith.addf %3, %5 : vector<8x32xf32>
    %7 = math.tanh %6 : vector<8x32xf32>
    %8 = vector.broadcast %1 : vector<8x1xf32> to vector<8x32xf32>
    %9 = arith.mulf %7, %8 : vector<8x32xf32>
    %10 = arith.truncf %9 : vector<8x32xf32> to vector<8x32xbf16>
    %c0_7 = arith.constant 0 : index
    %c0_8 = arith.constant 0 : index
    %11 = vector.load %arg5[%c0_7, %c0_8] : memref<32x32xbf16, #tpu.memory_space<vmem>>, vector<32x32xbf16>
    %cst_9 = arith.constant dense<0.000000e+00> : vector<8x32xf32>
    %12 = tpu.matmul %10, %11, %cst_9 {dimension_numbers = #tpu.dot_dimension_numbers<[1], [0], [0], [1], [0, 0, 1, 1], [], []>} : vector<8x32xbf16>, vector<32x32xbf16>, vector<8x32xf32> -> vector<8x32xf32>
    %c0_10 = arith.constant 0 : index
    %c0_11 = arith.constant 0 : index
    %13 = vector.load %arg6[%c0_10, %c0_11] : memref<1x32xf32, #tpu.memory_space<vmem>>, vector<1x32xf32>
    %14 = vector.broadcast %13 : vector<1x32xf32> to vector<8x32xf32>
    %15 = arith.addf %12, %14 : vector<8x32xf32>
    %16 = math.tanh %15 : vector<8x32xf32>
    %17 = arith.truncf %16 : vector<8x32xf32> to vector<8x32xbf16>
    %c0_12 = arith.constant 0 : index
    %c0_13 = arith.constant 0 : index
    %18 = vector.load %arg7[%c0_12, %c0_13] : memref<32x128xbf16, #tpu.memory_space<vmem>>, vector<32x128xbf16>
    %cst_14 = arith.constant dense<0.000000e+00> : vector<8x128xf32>
    %19 = tpu.matmul %17, %18, %cst_14 {dimension_numbers = #tpu.dot_dimension_numbers<[1], [0], [0], [1], [0, 0, 1, 1], [], []>} : vector<8x32xbf16>, vector<32x128xbf16>, vector<8x128xf32> -> vector<8x128xf32>
    %c0_15 = arith.constant 0 : index
    %c0_16 = arith.constant 0 : index
    %20 = vector.load %arg8[%c0_15, %c0_16] : memref<1x128xf32, #tpu.memory_space<vmem>>, vector<1x128xf32>
    %21 = vector.broadcast %20 : vector<1x128xf32> to vector<8x128xf32>
    %22 = arith.addf %19, %21 : vector<8x128xf32>
    %23 = math.tanh %22 : vector<8x128xf32>
    %c0_17 = arith.constant 0 : index
    %c0_18 = arith.constant 0 : index
    %24 = vector.load %arg12[%c0_17, %c0_18] : memref<8x128xf32, #tpu.memory_space<vmem>>, vector<8x128xf32>
    tpu.vector_store %arg12[%c0_17, %c0_18], %23 {strides = array<i32>} : memref<8x128xf32, #tpu.memory_space<vmem>>, vector<8x128xf32>,
    %25 = arith.truncf %23 : vector<8x128xf32> to vector<8x128xbf16>
    %c0_19 = arith.constant 0 : index
    %c0_20 = arith.constant 0 : index
    %26 = vector.load %arg9[%c0_19, %c0_20] : memref<128x128xbf16, #tpu.memory_space<vmem>>, vector<128x128xbf16>
    %cst_21 = arith.constant dense<0.000000e+00> : vector<8x128xf32>
    %27 = tpu.matmul %25, %26, %cst_21 {dimension_numbers = #tpu.dot_dimension_numbers<[1], [0], [0], [1], [0, 0, 1, 1], [], []>} : vector<8x128xbf16>, vector<128x128xbf16>, vector<8x128xf32> -> vector<8x128xf32>
    %c0_22 = arith.constant 0 : index
    %c0_23 = arith.constant 0 : index
    %28 = vector.load %arg10[%c0_22, %c0_23] : memref<1x128xf32, #tpu.memory_space<vmem>>, vector<1x128xf32>
    %29 = vector.broadcast %28 : vector<1x128xf32> to vector<8x128xf32>
    %30 = arith.addf %27, %29 : vector<8x128xf32>
    %c0_24 = arith.constant 0 : index
    %c0_25 = arith.constant 0 : index
    %31 = vector.load %arg11[%c0_24, %c0_25] : memref<8x128xf32, #tpu.memory_space<vmem>>, vector<8x128xf32>
    tpu.vector_store %arg11[%c0_24, %c0_25], %30 {strides = array<i32>} : memref<8x128xf32, #tpu.memory_space<vmem>>, vector<8x128xf32>,
    %c0_26 = arith.constant 0 : index
    %c0_27 = arith.constant 0 : index
    %32 = vector.load %arg2[%c0_26, %c0_27] : memref<8x1xi32, #tpu.memory_space<vmem>>, vector<8x1xi32>
    %33 = tpu.iota {dimensions = array<i32: 1>} : vector<8x128xi32>
    %c3_i32 = arith.constant 3 : i32
    %34 = vector.broadcast %c3_i32 : i32 to vector<8x128xi32>
    %35 = arith.cmpi slt, %33, %34 : vector<8x128xi32>
    %cst_28 = arith.constant -1.000000e+30 : f32
    %36 = vector.broadcast %cst_28 : f32 to vector<8x128xf32>
    %37 = arith.select %35, %30, %36 : vector<8x128xi1>, vector<8x128xf32>
    %cst_29 = arith.constant dense<0xFF800000> : vector<8xf32>
    %38 = vector.multi_reduction <maximumf>, %37, %cst_29 [1] : vector<8x128xf32> to vector<8xf32>
    %39 = vector.shape_cast %38 : vector<8xf32> to vector<8x1xf32>
    %40 = vector.broadcast %39 : vector<8x1xf32> to vector<8x128xf32>
    %41 = arith.subf %37, %40 : vector<8x128xf32>
    %42 = math.exp %41 : vector<8x128xf32>
    %cst_30 = arith.constant dense<0.000000e+00> : vector<8xf32>
    %43 = vector.multi_reduction <add>, %42, %cst_30 [1] : vector<8x128xf32> to vector<8xf32>
    %44 = vector.shape_cast %43 : vector<8xf32> to vector<8x1xf32>
    %45 = math.log %44 : vector<8x1xf32>
    %46 = arith.addf %39, %45 : vector<8x1xf32>
    %47 = vector.broadcast %32 : vector<8x1xi32> to vector<8x128xi32>
    %48 = arith.cmpi eq, %33, %47 : vector<8x128xi32>
    %49 = arith.extui %48 : vector<8x128xi1> to vector<8x128xi32>
    %50 = arith.sitofp %49 : vector<8x128xi32> to vector<8x128xf32>
    %51 = arith.mulf %30, %50 : vector<8x128xf32>
    %cst_31 = arith.constant dense<0.000000e+00> : vector<8xf32>
    %52 = vector.multi_reduction <add>, %51, %cst_31 [1] : vector<8x128xf32> to vector<8xf32>
    %53 = vector.shape_cast %52 : vector<8xf32> to vector<8x1xf32>
    %c0_i32 = arith.constant 0 : i32
    %54 = vector.broadcast %c0_i32 : i32 to vector<8x1xi32>
    %55 = arith.cmpi sge, %32, %54 : vector<8x1xi32>
    %56 = arith.extui %55 : vector<8x1xi1> to vector<8x1xi32>
    %57 = arith.sitofp %56 : vector<8x1xi32> to vector<8x1xf32>
    %58 = arith.subf %46, %53 : vector<8x1xf32>
    %59 = arith.mulf %57, %58 : vector<8x1xf32>
    %60 = vector.shape_cast %59 : vector<8x1xf32> to vector<1x8x1xf32>
    %cst_32 = arith.constant dense<0.000000e+00> : vector<1xf32>
    %61 = vector.multi_reduction <add>, %60, %cst_32 [1, 2] : vector<1x8x1xf32> to vector<1xf32>
    %62 = vector.shape_cast %61 : vector<1xf32> to vector<1x1x1xf32>
    %63 = vector.extract %62[0, 0, 0] : f32 from vector<1x1x1xf32>
    %64 = vector.shape_cast %57 : vector<8x1xf32> to vector<1x8x1xf32>
    %cst_33 = arith.constant dense<0.000000e+00> : vector<1xf32>
    %65 = vector.multi_reduction <add>, %64, %cst_33 [1, 2] : vector<1x8x1xf32> to vector<1xf32>
    %66 = vector.shape_cast %65 : vector<1xf32> to vector<1x1x1xf32>
    %67 = vector.extract %66[0, 0, 0] : f32 from vector<1x1x1xf32>
    %cst_34 = arith.constant 1.000000e+00 : f32
    %68 = arith.maximumf %67, %cst_34 : f32
    %69 = arith.divf %63, %68 : f32
    %70 = vector.broadcast %69 : f32 to vector<1x128xf32>
    %c0_35 = arith.constant 0 : index
    %c0_36 = arith.constant 0 : index
    %71 = vector.load %arg13[%c0_35, %c0_36] : memref<1x128xf32, #tpu.memory_space<vmem>>, vector<1x128xf32>
    tpu.vector_store %arg13[%c0_35, %c0_36], %70 {strides = array<i32>} : memref<1x128xf32, #tpu.memory_space<vmem>>, vector<1x128xf32>,
    return
  }
}

</mosaic_0001>

<llo_original>
// kernel: clinical_longformer_forward.1
$region0: #{clinical_longformer_forward.1}
  #allocation0 [shape = 'u32[]', space=smem, size = 0x4, offset = 0x4, fixed_abs, tag = 'smem constant byte address 0x4 - core index']
  #allocation1 [shape = 'u32[144,128]{1,0:T(1,128)}', space=vmem, size = 0x12000, scoped, tag = 'internal scratch']
  %s0 = inlined_call_operand.vmem [shape: bf16[8,32], index: 0, kind: input, shape index: {}]
  %s1 = inlined_call_operand.vmem [shape: f32[8,1], index: 1, kind: input, shape index: {}]
  %s2 = inlined_call_operand.vmem [shape: s32[8,1], index: 2, kind: input, shape index: {}]
  %s3 = inlined_call_operand.vmem [shape: bf16[32,32], index: 3, kind: input, shape index: {}]
  %s4 = inlined_call_operand.vmem [shape: f32[1,32], index: 4, kind: input, shape index: {}]
  %s5 = inlined_call_operand.vmem [shape: bf16[32,32], index: 5, kind: input, shape index: {}]
  %s6 = inlined_call_operand.vmem [shape: f32[1,32], index: 6, kind: input, shape index: {}]
  %s7 = inlined_call_operand.hbm [shape: bf16[32,128], index: 7, kind: input, shape index: {}]
  %s8 = inlined_call_operand.vmem [shape: f32[1,128], index: 8, kind: input, shape index: {}]
  %s9 = inlined_call_operand.vmem [shape: bf16[128,128], index: 9, kind: input, shape index: {}]
  %s10 = inlined_call_operand.vmem [shape: f32[1,128], index: 10, kind: input, shape index: {}]
  %s11 = inlined_call_operand.vmem [shape: f32[8,128], index: 11, kind: output, shape index: {0}]
  %s12 = inlined_call_operand.hbm [shape: f32[8,128], index: 12, kind: output, shape index: {1}]
  %s13 = inlined_call_operand.hbm [shape: f32[1,128], index: 13, kind: output, shape index: {2}]
  %14 = xla_tuple %s11, %s12, %s13
  %s15 = sld [smem:[#allocation0]]
  $region74: #{clinical_longformer_forward.1} parent=0
    _
  %s17 = ssub.s32 1, %s15
  %s18 = scalar_select 0, %s17, %s15
  $region1: #{clinical_longformer_forward.1} parent=0
    #allocation2 [shape = 'u8[8192]{0}', space=vmem, size = 0x2000, scoped, tag = 'input window, operand 7, single buffered']
    #allocation3 [shape = 's32[1]{0}', space=sflag, size = 0x4, scoped, tag = 'scoped memory for clinical_longformer_forward.1']
    #allocation4 [shape = 's32[1]{0}', space=sflag, size = 0x4, scoped, tag = 'scoped memory for clinical_longformer_forward.1']
    #allocation5 [shape = 'u8[4096]{0}', space=vmem, size = 0x1000, scoped, tag = 'output window, operand 1, single buffered']
    #allocation6 [shape = 'u8[512]{0}', space=vmem, size = 0x400, scoped, tag = 'output window, operand 2, single buffered']
    #allocation7 [shape = 's32[1]{0}', space=sflag, size = 0x4, scoped, tag = 'scoped memory for clinical_longformer_forward.1']
    %19 = vsyncpa [#allocation3], 0
    %20 = vsyncpa [#allocation4], 0
    %21 = vsyncpa [#allocation7], 0
    // Predicated region
    $region2: #{clinical_longformer_forward.1} parent=1 // pred_check
      _
    $region3: #{clinical_longformer_forward.1} parent=1 // pred_check_branch
      %23 = sbr.rel (0) target = $region5
    $region4: #{clinical_longformer_forward.1} parent=1 // pred_region
      _
    $region5: #{clinical_longformer_forward.1} parent=1 // pred_fallthru
      _
    // Predicated region
    $region6: #{clinical_longformer_forward.1} parent=1 // pred_check
      _
    $region7: #{clinical_longformer_forward.1} parent=1 // pred_check_branch
      %25 = sbr.rel (0) target = $region9
    $region8: #{clinical_longformer_forward.1} parent=1 // pred_region
      _
    $region9: #{clinical_longformer_forward.1} parent=1 // pred_fallthru
      _
    // Predicated region
    $region10: #{clinical_longformer_forward.1} parent=1 // pred_check
      _
    $region11: #{clinical_longformer_forward.1} parent=1 // pred_check_branch
      %27 = sbr.rel (0) target = $region13
    $region12: #{clinical_longformer_forward.1} parent=1 // pred_region
      _
    $region13: #{clinical_longformer_forward.1} parent=1 // pred_fallthru
      _
    // Predicated region
    $region14: #{clinical_longformer_forward.1} parent=1 // pred_check
      _
    $region15: #{clinical_longformer_forward.1} parent=1 // pred_check_branch
      %29 = sbr.rel (0) target = $region17
    $region16: #{clinical_longformer_forward.1} parent=1 // pred_region
      _
    $region17: #{clinical_longformer_forward.1} parent=1 // pred_fallthru
      _
    // Predicated region
    $region18: #{clinical_longformer_forward.1} parent=1 // pred_check
      _
    $region19: #{clinical_longformer_forward.1} parent=1 // pred_check_branch
      %31 = sbr.rel (0) target = $region21
    $region20: #{clinical_longformer_forward.1} parent=1 // pred_region
      _
    $region21: #{clinical_longformer_forward.1} parent=1 // pred_fallthru
      _
    // Predicated region
    $region22: #{clinical_longformer_forward.1} parent=1 // pred_check
      _
    $region23: #{clinical_longformer_forward.1} parent=1 // pred_check_branch
      %33 = sbr.rel (0) target = $region25
    $region24: #{clinical_longformer_forward.1} parent=1 // pred_region
      _
    $region25: #{clinical_longformer_forward.1} parent=1 // pred_fallthru
      _
    // Predicated region
    $region26: #{clinical_longformer_forward.1} parent=1 // pred_check
      _
    $region27: #{clinical_longformer_forward.1} parent=1 // pred_check_branch
      %35 = sbr.rel (0) target = $region29
    $region28: #{clinical_longformer_forward.1} parent=1 // pred_region
      _
    $region29: #{clinical_longformer_forward.1} parent=1 // pred_fallthru
      _
    // Predicated region
    $region30: #{clinical_longformer_forward.1} parent=1 // pred_check
      _
    $region31: #{clinical_longformer_forward.1} parent=1 // pred_check_branch
      %37 = sbr.rel (0) target = $region33
    $region32: #{clinical_longformer_forward.1} parent=1 // pred_region
      %s39 = ssub.s32 256, 256
      %40 = vsyncadd [#allocation3], %s39
      %s41 = sshll.u32 [#allocation2], 4
      %s42 = int_to_ptr.vmem [resolvable:$true] %s41
      %47 = dma.hbm_to_vmem [thread:$0]  %s7, 256, %s42, [#allocation3], 64, 64, 4
    $region33: #{clinical_longformer_forward.1} parent=1 // pred_fallthru
      _
    // Predicated region
    $region34: #{clinical_longformer_forward.1} parent=1 // pred_check
      _
    $region35: #{clinical_longformer_forward.1} parent=1 // pred_check_branch
      %49 = sbr.rel (0) target = $region37
    $region36: #{clinical_longformer_forward.1} parent=1 // pred_region
      _
    $region37: #{clinical_longformer_forward.1} parent=1 // pred_fallthru
      _
    // Predicated region
    $region38: #{clinical_longformer_forward.1} parent=1 // pred_check
      _
    $region39: #{clinical_longformer_forward.1} parent=1 // pred_check_branch
      %51 = sbr.rel (0) target = $region41
    $region40: #{clinical_longformer_forward.1} parent=1 // pred_region
      _
    $region41: #{clinical_longformer_forward.1} parent=1 // pred_fallthru
      _
    // Predicated region
    $region42: #{clinical_longformer_forward.1} parent=1 // pred_check
      _
    $region43: #{clinical_longformer_forward.1} parent=1 // pred_check_branch
      %53 = sbr.rel (0) target = $region45
    $region44: #{clinical_longformer_forward.1} parent=1 // pred_region
      _
    $region45: #{clinical_longformer_forward.1} parent=1 // pred_fallthru
      _
    // Predicated region
    $region46: #{clinical_longformer_forward.1} parent=1 // pred_check
      _
    $region47: #{clinical_longformer_forward.1} parent=1 // pred_check_branch
      %55 = sbr.rel (0) target = $region49
    $region48: #{clinical_longformer_forward.1} parent=1 // pred_region
      %56 = dma.done [#allocation3], 256
    $region49: #{clinical_longformer_forward.1} parent=1 // pred_fallthru
      _
    %v58 = vld [vmem:[%s0] sm:$0xf]
    %v59 = vld [vmem:[%s1] sm:$0xff]
    %v60 = vld [vmem:[%s3] sm:$0xf]
    %v61 = vld [vmem:[%s3 + $0x4] sm:$0xf]
    %v62 = vld [vmem:[%s3 + $0x8] sm:$0xf]
    %v63 = vld [vmem:[%s3 + $0xc] sm:$0xf]
    %v64 = vld [vmem:[%s4] sm:$0x1]
    %v66 = vlaneseq
    %v67 = vshrl.u32 %v66, 7
    %v68 = vsub.s32 0, %v67
    %v69 = vrot.slane %v64, %v68
    %v75 = vunpack.c.l.b16 %v60
    %v76 = vunpack.c.l.b16 %v61
    %v77 = vunpack.c.l.b16 %v62
    %v78 = vunpack.c.l.b16 %v63
    %v79 = vpack.c.b16 %v76, %v75
    %v80 = vpack.c.b16 %v78, %v77
    %vm83 = vcmask 261120
    %v85 = vsel %vm83, %v58, 0
    %87 = vmatprep.subr.bf16.mxu0 0
    %88 = vmatpush1.bf16.msra.mxu0 %v79
    %89 = vmatprep.subr.bf16.mxu0 0
    %90 = vmatpush1.bf16.msra.mxu0 %v80
    %91 = vmatprep.subr.bf16.mxu0 0
    %92 = vmatpush1.bf16.msra.mxu0 0
    %93 = vmatprep.subr.bf16.mxu0 0
    %94 = vmatpush1.bf16.msra.mxu0 0
    %95 = vmatprep.subr.bf16.mxu0 0
    %96 = vmatpush1.bf16.msra.mxu0 0
    %97 = vmatprep.subr.bf16.mxu0 0
    %98 = vmatpush1.bf16.msra.mxu0 0
    %99 = vmatprep.subr.bf16.mxu0 0
    %100 = vmatpush1.bf16.msra.mxu0 0
    %101 = vmatprep.subr.bf16.mxu0 0
    %102 = vmatpush1.bf16.msra.mxu0 0
    %103 = vmatprep.subr.bf16.mxu0 0
    %104 = vmatpush1.bf16.msra.mxu0 0
    %105 = vmatprep.subr.bf16.mxu0 0
    %106 = vmatpush1.bf16.msra.mxu0 0
    %107 = vmatprep.subr.bf16.mxu0 0
    %108 = vmatpush1.bf16.msra.mxu0 0
    %109 = vmatprep.subr.bf16.mxu0 0
    %110 = vmatpush1.bf16.msra.mxu0 0
    %111 = vmatprep.subr.bf16.mxu0 0
    %112 = vmatpush1.bf16.msra.mxu0 0
    %113 = vmatprep.subr.bf16.mxu0 0
    %114 = vmatpush1.bf16.msra.mxu0 0
    %115 = vmatprep.subr.bf16.mxu0 0
    %116 = vmatpush1.bf16.msra.mxu0 0
    %117 = vmatprep.subr.bf16.mxu0 0
    %118 = vmatpush1.bf16.msra.mxu0 0
    %119 = vmatprep.mubr.bf16.mxu0 0
    %120 = vmatmul.mubr.bf16.gmra.mrb[0].mxu0 %v85
    %v121 = vpop.f32.mrb[0].mxu0
    %v122 = vadd.f32 %v69, %v121
    %v123 = vpop.f32.mrb[0].mxu0
    %v124 = vpop.f32.mrb[0].mxu0
    %v125 = vpop.f32.mrb[0].mxu0
    %126 = vdwg.mxu0
    %v127 = vtanh.pop %v122
    %129 = vset.pattern.permute.xlu0 0
    %130 = vperm.xlu0 %129, %v59
    %v131 = vpop.permute.xlu0 %130
    %v133 = vmul.f32 %v127, %v131
    %v134 = vpack.c.bf16 %v133, %v133
    %v135 = vld [vmem:[%s5] sm:$0xf]
    %v136 = vld [vmem:[%s5 + $0x4] sm:$0xf]
    %v137 = vld [vmem:[%s5 + $0x8] sm:$0xf]
    %v138 = vld [vmem:[%s5 + $0xc] sm:$0xf]
    %v139 = vld [vmem:[%s6] sm:$0x1]
    %v141 = vlaneseq
    %v142 = vshrl.u32 %v141, 7
    %v143 = vsub.s32 0, %v142
    %v144 = vrot.slane %v139, %v143
    %v150 = vunpack.c.l.b16 %v135
    %v151 = vunpack.c.l.b16 %v136
    %v152 = vunpack.c.l.b16 %v137
    %v153 = vunpack.c.l.b16 %v138
    %v154 = vpack.c.b16 %v151, %v150
    %v155 = vpack.c.b16 %v153, %v152
    %v159 = vsel %vm83, %v134, 0
    %161 = vmatprep.subr.bf16.mxu0 0
    %162 = vmatpush1.bf16.msra.mxu0 %v154
    %163 = vmatprep.subr.bf16.mxu0 0
    %164 = vmatpush1.bf16.msra.mxu0 %v155
    %165 = vmatprep.subr.bf16.mxu0 0
    %166 = vmatpush1.bf16.msra.mxu0 0
    %167 = vmatprep.subr.bf16.mxu0 0
    %168 = vmatpush1.bf16.msra.mxu0 0
    %169 = vmatprep.subr.bf16.mxu0 0
    %170 = vmatpush1.bf16.msra.mxu0 0
    %171 = vmatprep.subr.bf16.mxu0 0
    %172 = vmatpush1.bf16.msra.mxu0 0
    %173 = vmatprep.subr.bf16.mxu0 0
    %174 = vmatpush1.bf16.msra.mxu0 0
    %175 = vmatprep.subr.bf16.mxu0 0
    %176 = vmatpush1.bf16.msra.mxu0 0
    %177 = vmatprep.subr.bf16.mxu0 0
    %178 = vmatpush1.bf16.msra.mxu0 0
    %179 = vmatprep.subr.bf16.mxu0 0
    %180 = vmatpush1.bf16.msra.mxu0 0
    %181 = vmatprep.subr.bf16.mxu0 0
    %182 = vmatpush1.bf16.msra.mxu0 0
    %183 = vmatprep.subr.bf16.mxu0 0
    %184 = vmatpush1.bf16.msra.mxu0 0
    %185 = vmatprep.subr.bf16.mxu0 0
    %186 = vmatpush1.bf16.msra.mxu0 0
    %187 = vmatprep.subr.bf16.mxu0 0
    %188 = vmatpush1.bf16.msra.mxu0 0
    %189 = vmatprep.subr.bf16.mxu0 0
    %190 = vmatpush1.bf16.msra.mxu0 0
    %191 = vmatprep.subr.bf16.mxu0 0
    %192 = vmatpush1.bf16.msra.mxu0 0
    %193 = vmatprep.mubr.bf16.mxu0 0
    %194 = vmatmul.mubr.bf16.gmra.mrb[0].mxu0 %v159
    %v195 = vpop.f32.mrb[0].mxu0
    %v196 = vadd.f32 %v144, %v195
    %v197 = vpop.f32.mrb[0].mxu0
    %v198 = vpop.f32.mrb[0].mxu0
    %v199 = vpop.f32.mrb[0].mxu0
    %200 = vdwg.mxu0
    %v201 = vtanh.pop %v196
    %v202 = vpack.c.bf16 %v201, %v201
    %v203 = vld [vmem:[#allocation2] sm:$0xf]
    %v204 = vld [vmem:[#allocation2 + $0x4] sm:$0xf]
    %v205 = vld [vmem:[#allocation2 + $0x8] sm:$0xf]
    %v206 = vld [vmem:[#allocation2 + $0xc] sm:$0xf]
    %v207 = vld [vmem:[%s8] sm:$0x1]
    %v209 = vlaneseq
    %v210 = vshrl.u32 %v209, 7
    %v211 = vsub.s32 0, %v210
    %v212 = vrot.slane %v207, %v211
    %v218 = vunpack.c.l.b16 %v203
    %v219 = vunpack.c.l.b16 %v204
    %v220 = vunpack.c.l.b16 %v205
    %v221 = vunpack.c.l.b16 %v206
    %v222 = vpack.c.b16 %v219, %v218
    %v223 = vpack.c.b16 %v221, %v220
    %v227 = vsel %vm83, %v202, 0
    %229 = vmatprep.subr.bf16.mxu0 0
    %230 = vmatpush1.bf16.msra.mxu0 %v222
    %231 = vmatprep.subr.bf16.mxu0 0
    %232 = vmatpush1.bf16.msra.mxu0 %v223
    %233 = vmatprep.subr.bf16.mxu0 0
    %234 = vmatpush1.bf16.msra.mxu0 0
    %235 = vmatprep.subr.bf16.mxu0 0
    %236 = vmatpush1.bf16.msra.mxu0 0
    %237 = vmatprep.subr.bf16.mxu0 0
    %238 = vmatpush1.bf16.msra.mxu0 0
    %239 = vmatprep.subr.bf16.mxu0 0
    %240 = vmatpush1.bf16.msra.mxu0 0
    %241 = vmatprep.subr.bf16.mxu0 0
    %242 = vmatpush1.bf16.msra.mxu0 0
    %243 = vmatprep.subr.bf16.mxu0 0
    %244 = vmatpush1.bf16.msra.mxu0 0
    %245 = vmatprep.subr.bf16.mxu0 0
    %246 = vmatpush1.bf16.msra.mxu0 0
    %247 = vmatprep.subr.bf16.mxu0 0
    %248 = vmatpush1.bf16.msra.mxu0 0
    %249 = vmatprep.subr.bf16.mxu0 0
    %250 = vmatpush1.bf16.msra.mxu0 0
    %251 = vmatprep.subr.bf16.mxu0 0
    %252 = vmatpush1.bf16.msra.mxu0 0
    %253 = vmatprep.subr.bf16.mxu0 0
    %254 = vmatpush1.bf16.msra.mxu0 0
    %255 = vmatprep.subr.bf16.mxu0 0
    %256 = vmatpush1.bf16.msra.mxu0 0
    %257 = vmatprep.subr.bf16.mxu0 0
    %258 = vmatpush1.bf16.msra.mxu0 0
    %259 = vmatprep.subr.bf16.mxu0 0
    %260 = vmatpush1.bf16.msra.mxu0 0
    %261 = vmatprep.mubr.bf16.mxu0 0
    %262 = vmatmul.mubr.bf16.gmra.mrb[0].mxu0 %v227
    %v263 = vpop.f32.mrb[0].mxu0
    %v264 = vadd.f32 %v212, %v263
    %v265 = vpop.f32.mrb[0].mxu0
    %v266 = vpop.f32.mrb[0].mxu0
    %v267 = vpop.f32.mrb[0].mxu0
    %268 = vdwg.mxu0
    %v269 = vtanh.pop %v264
    %270 = vst [vmem:[#allocation5] sm:$0xff] %v269
    %v271 = vpack.c.bf16 %v269, %v269
    %v272 = vld [vmem:[%s9] sm:$0xf]
    %v273 = vld [vmem:[%s9 + $0x4] sm:$0xf]
    %v274 = vld [vmem:[%s9 + $0x8] sm:$0xf]
    %v275 = vld [vmem:[%s9 + $0xc] sm:$0xf]
    %v276 = vld [vmem:[%s9 + $0x10] sm:$0xf]
    %v277 = vld [vmem:[%s9 + $0x14] sm:$0xf]
    %v278 = vld [vmem:[%s9 + $0x18] sm:$0xf]
    %v279 = vld [vmem:[%s9 + $0x1c] sm:$0xf]
    %v280 = vld [vmem:[%s9 + $0x20] sm:$0xf]
    %v281 = vld [vmem:[%s9 + $0x24] sm:$0xf]
    %v282 = vld [vmem:[%s9 + $0x28] sm:$0xf]
    %v283 = vld [vmem:[%s9 + $0x2c] sm:$0xf]
    %v284 = vld [vmem:[%s9 + $0x30] sm:$0xf]
    %v285 = vld [vmem:[%s9 + $0x34] sm:$0xf]
    %v286 = vld [vmem:[%s9 + $0x38] sm:$0xf]
    %v287 = vld [vmem:[%s9 + $0x3c] sm:$0xf]
    %v288 = vld [vmem:[%s10] sm:$0x1]
    %v290 = vlaneseq
    %v291 = vshrl.u32 %v290, 7
    %v292 = vsub.s32 0, %v291
    %v293 = vrot.slane %v288, %v292
    %v311 = vunpack.c.l.b16 %v272
    %v312 = vunpack.c.l.b16 %v273
    %v313 = vunpack.c.l.b16 %v274
    %v314 = vunpack.c.l.b16 %v275
    %v315 = vunpack.c.l.b16 %v276
    %v316 = vunpack.c.l.b16 %v277
    %v317 = vunpack.c.l.b16 %v278
    %v318 = vunpack.c.l.b16 %v279
    %v319 = vunpack.c.l.b16 %v280
    %v320 = vunpack.c.l.b16 %v281
    %v321 = vunpack.c.l.b16 %v282
    %v322 = vunpack.c.l.b16 %v283
    %v323 = vunpack.c.l.b16 %v284
    %v324 = vunpack.c.l.b16 %v285
    %v325 = vunpack.c.l.b16 %v286
    %v326 = vunpack.c.l.b16 %v287
    %v327 = vpack.c.b16 %v312, %v311
    %v328 = vpack.c.b16 %v314, %v313
    %v329 = vpack.c.b16 %v316, %v315
    %v330 = vpack.c.b16 %v318, %v317
    %v331 = vpack.c.b16 %v320, %v319
    %v332 = vpack.c.b16 %v322, %v321
    %v333 = vpack.c.b16 %v324, %v323
    %v334 = vpack.c.b16 %v326, %v325
    %343 = vmatprep.subr.bf16.mxu0 0
    %344 = vmatpush1.bf16.msra.mxu0 %v327
    %345 = vmatprep.subr.bf16.mxu0 0
    %346 = vmatpush1.bf16.msra.mxu0 %v328
    %347 = vmatprep.subr.bf16.mxu0 0
    %348 = vmatpush1.bf16.msra.mxu0 %v329
    %349 = vmatprep.subr.bf16.mxu0 0
    %350 = vmatpush1.bf16.msra.mxu0 %v330
    %351 = vmatprep.subr.bf16.mxu0 0
    %352 = vmatpush1.bf16.msra.mxu0 %v331
    %353 = vmatprep.subr.bf16.mxu0 0
    %354 = vmatpush1.bf16.msra.mxu0 %v332
    %355 = vmatprep.subr.bf16.mxu0 0
    %356 = vmatpush1.bf16.msra.mxu0 %v333
    %357 = vmatprep.subr.bf16.mxu0 0
    %358 = vmatpush1.bf16.msra.mxu0 %v334
    %359 = vmatprep.subr.bf16.mxu0 0
    %360 = vmatpush1.bf16.msra.mxu0 0
    %361 = vmatprep.subr.bf16.mxu0 0
    %362 = vmatpush1.bf16.msra.mxu0 0
    %363 = vmatprep.subr.bf16.mxu0 0
    %364 = vmatpush1.bf16.msra.mxu0 0
    %365 = vmatprep.subr.bf16.mxu0 0
    %366 = vmatpush1.bf16.msra.mxu0 0
    %367 = vmatprep.subr.bf16.mxu0 0
    %368 = vmatpush1.bf16.msra.mxu0 0
    %369 = vmatprep.subr.bf16.mxu0 0
    %370 = vmatpush1.bf16.msra.mxu0 0
    %371 = vmatprep.subr.bf16.mxu0 0
    %372 = vmatpush1.bf16.msra.mxu0 0
    %373 = vmatprep.subr.bf16.mxu0 0
    %374 = vmatpush1.bf16.msra.mxu0 0
    %375 = vmatprep.mubr.bf16.mxu0 0
    %376 = vmatmul.mubr.bf16.gmra.mrb[0].mxu0 %v271
    %v377 = vpop.f32.mrb[0].mxu0
    %v378 = vadd.f32 %v293, %v377
    %v379 = vpop.f32.mrb[0].mxu0
    %v380 = vpop.f32.mrb[0].mxu0
    %v381 = vpop.f32.mrb[0].mxu0
    %382 = vdwg.mxu0
    %383 = vst [vmem:[%s11] sm:$0xff] %v378
    %v384 = vld [vmem:[%s2] sm:$0xff]
    %v385 = vlaneseq
    %v386 = vand.u32 %v385, 127
    %vm387 = vcmp.lt.s32.totalorder %v386, 3
    %v388 = vsel %vm387, %v378, -1e+30
    %389 = vmax.xlane.f32.xlu0 %v388
    %v390 = vpop.xlane.xlu0 %389
    %v391 = vsub.f32 %v388, %v390
    %v392 = vmul.f32 %v391, 1.442695
    %v393 = vpow.pop %v392
    %394 = vadd.xlane.f32.xlu0 %v393
    %v395 = vpop.xlane.xlu0 %394
    %v396 = vlog2.pop %v395
    %v397 = vmul.f32 %v396, 0.6931472
    %v398 = vadd.f32 %v390, %v397
    %399 = vset.pattern.permute.xlu0 0
    %400 = vperm.xlu0 %399, %v384
    %v401 = vpop.permute.xlu0 %400
    %vm402 = vcmp.eq.s32.totalorder %v386, %v401
    %v403 = vsel %vm402, 1, 0
    %v404 = vcvt.s32.f32 %v403
    %v405 = vmul.f32 %v378, %v404
    %406 = vadd.xlane.f32.xlu0 %v405
    %v407 = vpop.xlane.xlu0 %406
    %vm408 = vcmp.ge.s32.totalorder %v384, 0
    %v409 = vsel %vm408, 1, 0
    %v410 = vcvt.s32.f32 %v409
    %v411 = vsub.f32 %v398, %v407
    %v412 = vmul.f32 %v410, %v411
    %vm413 = vcmask 7168
    %v414 = vsel %vm413, %v412, 0.0
    %415 = vadd.xlane.f32.xlu0 %v414
    %v416 = vpop.xlane.xlu0 %415
    %v417 = vrot.slane %v416, 4
    %v418 = vadd.f32 %v416, %v417
    %v419 = vrot.slane %v418, 2
    %v420 = vadd.f32 %v418, %v419
    %v421 = vrot.slane %v420, 1
    %v422 = vadd.f32 %v420, %v421
    %s423 = vtos %v422
    %v424 = vsel %vm413, %v410, 0.0
    %425 = vadd.xlane.f32.xlu0 %v424
    %v426 = vpop.xlane.xlu0 %425
    %v427 = vrot.slane %v426, 4
    %v428 = vadd.f32 %v426, %v427
    %v429 = vrot.slane %v428, 2
    %v430 = vadd.f32 %v428, %v429
    %v431 = vrot.slane %v430, 1
    %v432 = vadd.f32 %v430, %v431
    %s433 = vtos %v432
    %s434 = smax.f32 %s433, 1.0
    %v435 = vstv %s434
    %v436 = vrcp.pop %v435
    %s437 = vtos %v436
    %s438 = smul.f32 %s423, %s437
    %v439 = vstv %s438
    %440 = vst [vmem:[#allocation6] sm:$0x1] %v439
    // Predicated region
    $region50: #{clinical_longformer_forward.1} parent=1 // pred_check
      _
    $region51: #{clinical_longformer_forward.1} parent=1 // pred_check_branch
      %442 = sbr.rel (0) target = $region53
    $region52: #{clinical_longformer_forward.1} parent=1 // pred_region
      _
    $region53: #{clinical_longformer_forward.1} parent=1 // pred_fallthru
      _
    // Predicated region
    $region54: #{clinical_longformer_forward.1} parent=1 // pred_check
      _
    $region55: #{clinical_longformer_forward.1} parent=1 // pred_check_branch
      %444 = sbr.rel (0) target = $region57
    $region56: #{clinical_longformer_forward.1} parent=1 // pred_region
      %s446 = ssub.s32 128, 128
      %447 = vsyncadd [#allocation4], %s446
      %s449 = sshll.u32 [#allocation5], 4
      %s450 = int_to_ptr.vmem [resolvable:$true] %s449
      %452 = dma.vmem_to_hbm [thread:$0]  %s450, 128, %s12, [#allocation4]
    $region57: #{clinical_longformer_forward.1} parent=1 // pred_fallthru
      _
    // Predicated region
    $region58: #{clinical_longformer_forward.1} parent=1 // pred_check
      _
    $region59: #{clinical_longformer_forward.1} parent=1 // pred_check_branch
      %454 = sbr.rel (0) target = $region61
    $region60: #{clinical_longformer_forward.1} parent=1 // pred_region
      %s456 = ssub.s32 16, 16
      %457 = vsyncadd [#allocation7], %s456
      %s459 = sshll.u32 [#allocation6], 4
      %s460 = int_to_ptr.vmem [resolvable:$true] %s459
      %462 = dma.vmem_to_hbm [thread:$0]  %s460, 16, %s13, [#allocation7]
    $region61: #{clinical_longformer_forward.1} parent=1 // pred_fallthru
      _
    // Predicated region
    $region62: #{clinical_longformer_forward.1} parent=1 // pred_check
      _
    $region63: #{clinical_longformer_forward.1} parent=1 // pred_check_branch
      %464 = sbr.rel (0) target = $region65
    $region64: #{clinical_longformer_forward.1} parent=1 // pred_region
      _
    $region65: #{clinical_longformer_forward.1} parent=1 // pred_fallthru
      _
    // Predicated region
    $region66: #{clinical_longformer_forward.1} parent=1 // pred_check
      _
    $region67: #{clinical_longformer_forward.1} parent=1 // pred_check_branch
      %466 = sbr.rel (0) target = $region69
    $region68: #{clinical_longformer_forward.1} parent=1 // pred_region
      %467 = dma.done [#allocation4], 128
    $region69: #{clinical_longformer_forward.1} parent=1 // pred_fallthru
      _
    // Predicated region
    $region70: #{clinical_longformer_forward.1} parent=1 // pred_check
      _
    $region71: #{clinical_longformer_forward.1} parent=1 // pred_check_branch
      %469 = sbr.rel (0) target = $region73
    $region72: #{clinical_longformer_forward.1} parent=1 // pred_region
      %470 = dma.done [#allocation7], 16
    $region73: #{clinical_longformer_forward.1} parent=1 // pred_fallthru
      _
    %471 = vsyncpa [#allocation3], 1
    %472 = vsyncpa [#allocation4], 1
    %473 = vsyncpa [#allocation7], 1

</llo_original>
